<compile_context>
chip_gen: v6e
topology: v6e:2x2x1
jax: 0.10.0
libtpu: 0.0.40
codegen_flags: <defaults>
</compile_context>

<pallas_src>
import functools
import math

import jax
import jax.numpy as jnp
from jax.experimental import pallas as pl
from jax.experimental.pallas import tpu as pltpu


def _patch_merge_kernel(x_ref, wa_ref, wb_ref, bias_ref, o_ref):
    """Fused gather + LayerNorm(4C) + Linear(4C->2C) on one tile of row-pairs.

    x_ref:    (tr, 2, Wh, 2C)  tr row-pairs; parity 0 = [x0|x2], parity 1 = [x1|x3]
    wa_ref:   (2C, 2C)  bf16   gamma-folded weight rows for the parity-0 half
    wb_ref:   (2C, 2C)  bf16   gamma-folded weight rows for the parity-1 half
    bias_ref: (1, 2C)   f32    beta @ W (folded LayerNorm bias)
    o_ref:    (tr*Wh, 2C)      output tokens (lane/sublane-dense 2D slab)
    """
    tr, _, wh, c2 = x_ref.shape
    n_tok = tr * wh
    inv_n = 1.0 / (2 * c2)  # 1 / 4C

    # Two parity halves in their native (tr, Wh, 2C) layout; f32 for LN stats.
    a = x_ref[:, 0, :, :].astype(jnp.float32)   # [x0 | x2]
    b = x_ref[:, 1, :, :].astype(jnp.float32)   # [x1 | x3]

    # LayerNorm over the virtual 4C concatenation, eps = 1e-5.  Strictly
    # row-wise, so padded rows of a ragged last tile cannot contaminate valid
    # tokens (their outputs are discarded by the clipped output write).
    mean = (jnp.sum(a, axis=-1, keepdims=True)
            + jnp.sum(b, axis=-1, keepdims=True)) * inv_n
    ac = a - mean
    bc = b - mean
    var = (jnp.sum(ac * ac, axis=-1, keepdims=True)
           + jnp.sum(bc * bc, axis=-1, keepdims=True)) * inv_n
    inv = jax.lax.rsqrt(var + 1e-5)

    # Normalize, cast to bf16, then flatten (tr*Wh is a multiple of 8 -> the
    # reshape is layout-free; on non-multiple Wh the copy is half-width bf16).
    a_n = (ac * inv).astype(wa_ref.dtype).reshape(n_tok, c2)
    b_n = (bc * inv).astype(wb_ref.dtype).reshape(n_tok, c2)

    # Split (2C + 2C -> 2C) MXU matmul, f32 accumulation; gamma/beta folded.
    y = jnp.dot(a_n, wa_ref[...], preferred_element_type=jnp.float32)
    y = y + jnp.dot(b_n, wb_ref[...], preferred_element_type=jnp.float32)
    y = y + bias_ref[...]

    o_ref[...] = y.astype(o_ref.dtype)


def _tpu_budget_and_cores():
    """Returns (vmem_limit_bytes, tile_budget_bytes, num_tensorcores)."""
    vmem_cap = 64 * 1024 * 1024   # conservative fallback (v7x per-TC size)
    cores = 1                     # conservative fallback: never force a split
    try:
        info = pltpu.get_tpu_info()
        vmem_cap = int(getattr(info, "vmem_capacity_bytes", vmem_cap))
        for name in ("num_tensorcores", "tensorcore_count", "num_cores",
                     "core_count", "cores_per_chip"):
            val = getattr(info, name, None)
            if isinstance(val, int) and val > 0:
                cores = val
                break
    except Exception:
        pass
    # ~64 MiB scoped limit on 128 MiB parts (v5e/v6e), ~32 MiB on 64 MiB v7x.
    vmem_limit = max(16 * 1024 * 1024, min(vmem_cap // 2, 64 * 1024 * 1024))
    budget = (3 * vmem_limit) // 4   # headroom for compiler scratch
    return vmem_limit, budget, cores


def _pick_row_tile(R, Wh, C2, in_itemsize, out_itemsize, budget, num_cores):
    """Row-pairs per grid step (tr).

    Invariants: tr*Wh is a multiple of 8 (sublane-dense output block) unless
    tr == R (block == full array); double-buffered blocks plus in-kernel
    temporaries fit the budget; grid-step count is a multiple of the TC count
    when that is cheap; no forced split on single-TensorCore chips.
    """
    per_token = (2 * (2 * C2) * in_itemsize   # input block (4C feats), double buffered
                 + 2 * C2 * out_itemsize      # output block, double buffered
                 + 12 * C2)                   # f32 LN temps + bf16 operands + f32 acc
    fixed = 2 * (2 * C2 * C2 * 2 + 4 * C2)    # bf16 weights + f32 bias, double buffered
    max_tokens = min(8192, max(Wh, (budget - fixed) // per_token))

    align = 8 // math.gcd(Wh, 8)              # smallest tr with (tr*Wh) % 8 == 0
    max_tr = max(1, min(R, max_tokens // Wh))

    if max_tr >= R:
        n_steps = 1
    else:
        n_steps = -(-R // max(align, (max_tr // align) * align))
    if num_cores > 1 and R >= 2 * align:
        # Round the step count up to a multiple of the TC count so the
        # 'parallel' grid axis load-balances across megacore TensorCores.
        n_steps = -(-n_steps // num_cores) * num_cores

    if n_steps <= 1:
        return R
    tr = -(-R // n_steps)
    tr = -(-tr // align) * align              # round up to sublane alignment
    return R if tr >= R else tr


@functools.partial(jax.jit, static_argnames=("input_resolution",))
def patch_merging(x, norm_weight, norm_bias, reduction_weight, *, input_resolution):
    """Forward of PatchMerging.

    Args:
      x:                (B, H*W, C)   (f32 or bf16; output dtype follows x)
      norm_weight:      (4C,)     LayerNorm gamma
      norm_bias:        (4C,)     LayerNorm beta
      reduction_weight: (2C, 4C)  nn.Linear weight (PyTorch layout: out, in)
      input_resolution: (H, W) static

    Returns: (B, H/2 * W/2, 2C)
    """
    H, W = input_resolution
    B, L, C = x.shape
    assert L == H * W, "Input feature has wrong size"
    assert H % 2 == 0 and W % 2 == 0, "PatchMerging requires even H, W"

    C2 = 2 * C
    R = B * (H // 2)          # number of 2-row pairs
    Wh = W // 2               # merged tokens per row-pair

    # Free row-major view: (B, H*W, C) -> (R, 2, Wh, 2C).
    # parity 0 token = [x0 | x2], parity 1 token = [x1 | x3].
    xv = x.reshape(R, 2, Wh, C2)

    # Permute params to the [x0, x2, x1, x3] feature order of the view, then
    # fold the LayerNorm affine into the projection (once, outside the kernel).
    idx = jnp.concatenate([jnp.arange(0, C), jnp.arange(2 * C, 3 * C),
                           jnp.arange(C, 2 * C), jnp.arange(3 * C, 4 * C)])
    wt = reduction_weight.T.astype(jnp.float32)                  # (4C, 2C)
    w_fold = norm_weight.astype(jnp.float32)[idx][:, None] * wt[idx, :]
    wa = w_fold[:C2, :].astype(jnp.bfloat16)                     # parity-0 rows
    wb = w_fold[C2:, :].astype(jnp.bfloat16)                     # parity-1 rows
    bias = (norm_bias.astype(jnp.float32) @ wt).reshape(1, C2)   # beta @ W

    vmem_limit, budget, num_cores = _tpu_budget_and_cores()
    tr = _pick_row_tile(R, Wh, C2, x.dtype.itemsize, x.dtype.itemsize,
                        budget, num_cores)
    grid = (pl.cdiv(R, tr),)   # ragged last tile allowed (LN is row-wise)
    tok = tr * Wh

    out = pl.pallas_call(
        _patch_merge_kernel,
        out_shape=jax.ShapeDtypeStruct((R * Wh, C2), x.dtype),
        grid=grid,
        in_specs=[
            pl.BlockSpec((tr, 2, Wh, C2), lambda i: (i, 0, 0, 0)),
            pl.BlockSpec((C2, C2), lambda i: (0, 0)),
            pl.BlockSpec((C2, C2), lambda i: (0, 0)),
            pl.BlockSpec((1, C2), lambda i: (0, 0)),
        ],
        out_specs=pl.BlockSpec((tok, C2), lambda i: (i, 0)),
        compiler_params=pltpu.CompilerParams(
            dimension_semantics=("parallel",),
            vmem_limit_bytes=vmem_limit),
    )(xv, wa, wb, bias)

    return out.reshape(B, (H // 2) * (W // 2), C2)


def _reference(x, norm_weight, norm_bias, reduction_weight, input_resolution):
    """Pure-JAX reference mirroring the PyTorch forward (all f32)."""
    H, W = input_resolution
    B, L, C = x.shape
    xg = x.reshape(B, H, W, C)
    x0 = xg[:, 0::2, 0::2, :]
    x1 = xg[:, 1::2, 0::2, :]
    x2 = xg[:, 0::2, 1::2, :]
    x3 = xg[:, 1::2, 1::2, :]
    xm = jnp.concatenate([x0, x1, x2, x3], axis=-1).reshape(B, -1, 4 * C)
    mean = jnp.mean(xm, axis=-1, keepdims=True)
    var = jnp.mean((xm - mean) ** 2, axis=-1, keepdims=True)
    xn = (xm - mean) * jax.lax.rsqrt(var + 1e-5)
    xn = xn * norm_weight + norm_bias
    return jnp.einsum("blc,oc->blo", xn, reduction_weight)


if __name__ == "__main__":
    key = jax.random.PRNGKey(0)
    k_x, k_w = jax.random.split(key)

    B = 2
    H = W = 16
    C = 32                         # dim
    input_resolution = (H, W)

    x = jax.random.normal(k_x, (B, H * W, C), dtype=jnp.float32)

    # Deterministic parameter init (shapes per nn.Linear(4C, 2C, bias=False)
    # and nn.LayerNorm(4C)); non-trivial gamma/beta to exercise the fold.
    bound = 1.0 / jnp.sqrt(4.0 * C)
    reduction_weight = jax.random.uniform(
        k_w, (2 * C, 4 * C), minval=-bound, maxval=bound, dtype=jnp.float32)
    norm_weight = 1.0 + 0.1 * jnp.cos(jnp.arange(4 * C, dtype=jnp.float32))
    norm_bias = 0.05 * jnp.sin(jnp.arange(4 * C, dtype=jnp.float32))

    out = patch_merging(x, norm_weight, norm_bias, reduction_weight,
                        input_resolution=input_resolution)
    out = jax.block_until_ready(out)

    ref = _reference(x, norm_weight, norm_bias, reduction_weight,
                     input_resolution)
    assert out.shape == (B, (H // 2) * (W // 2), 2 * C), out.shape
    # bf16 MXU matmul (f32 accumulation) -> loosened tolerance vs f32 reference.
    assert jnp.allclose(out, ref, atol=2e-2, rtol=2e-2), float(
        jnp.max(jnp.abs(out - ref)))

    print("KERNEL_OK")
</pallas_src>

<mosaic_0001>
module attributes {stable_mosaic.version = 11 : i64} {
  func.func @_patch_merge_kernel(%arg0: i32, %arg1: memref<16x2x8x64xf32, #tpu.memory_space<vmem>>, %arg2: memref<64x64xbf16, #tpu.memory_space<vmem>>, %arg3: memref<64x64xbf16, #tpu.memory_space<vmem>>, %arg4: memref<1x64xf32, #tpu.memory_space<vmem>>, %arg5: memref<128x64xf32, #tpu.memory_space<vmem>>) attributes {dimension_semantics = [#tpu.dimension_semantics<parallel>], iteration_bounds = array<i64: 1>, scalar_prefetch = 0 : i64, scratch_operands = 0 : i64, tpu.core_type = #tpu.core_type<tc>, window_params = [{transform_indices = @transform_0, window_bounds = array<i64: 16, 2, 8, 64>}, {pipeline_mode = #tpu.pipeline_mode<synchronous>, transform_indices = @transform_1, window_bounds = array<i64: 64, 64>}, {pipeline_mode = #tpu.pipeline_mode<synchronous>, transform_indices = @transform_2, window_bounds = array<i64: 64, 64>}, {pipeline_mode = #tpu.pipeline_mode<synchronous>, transform_indices = @transform_3, window_bounds = array<i64: 1, 64>}, {transform_indices = @transform_4, window_bounds = array<i64: 128, 64>}]} {
    %c0 = arith.constant 0 : index
    %c0_0 = arith.constant 0 : index
    %c0_1 = arith.constant 0 : index
    %c0_2 = arith.constant 0 : index
    %0 = vector.load %arg1[%c0, %c0_0, %c0_1, %c0_2] : memref<16x2x8x64xf32, #tpu.memory_space<vmem>>, vector<16x1x8x64xf32>
    %1 = vector.shape_cast %0 : vector<16x1x8x64xf32> to vector<16x8x64xf32>
    %c0_3 = arith.constant 0 : index
    %c1 = arith.constant 1 : index
    %c0_4 = arith.constant 0 : index
    %c0_5 = arith.constant 0 : index
    %2 = vector.load %arg1[%c0_3, %c1, %c0_4, %c0_5] : memref<16x2x8x64xf32, #tpu.memory_space<vmem>>, vector<16x1x8x64xf32>
    %3 = vector.shape_cast %2 : vector<16x1x8x64xf32> to vector<16x8x64xf32>
    %cst = arith.constant dense<0.000000e+00> : vector<16x8xf32>
    %4 = vector.multi_reduction <add>, %1, %cst [2] : vector<16x8x64xf32> to vector<16x8xf32>
    %5 = vector.shape_cast %4 : vector<16x8xf32> to vector<16x8x1xf32>
    %cst_6 = arith.constant dense<0.000000e+00> : vector<16x8xf32>
    %6 = vector.multi_reduction <add>, %3, %cst_6 [2] : vector<16x8x64xf32> to vector<16x8xf32>
    %7 = vector.shape_cast %6 : vector<16x8xf32> to vector<16x8x1xf32>
    %8 = arith.addf %5, %7 : vector<16x8x1xf32>
    %cst_7 = arith.constant 7.812500e-03 : f32
    %9 = vector.broadcast %cst_7 : f32 to vector<16x8x1xf32>
    %10 = arith.mulf %8, %9 : vector<16x8x1xf32>
    %11 = vector.broadcast %10 : vector<16x8x1xf32> to vector<16x8x64xf32>
    %12 = arith.subf %1, %11 : vector<16x8x64xf32>
    %13 = vector.broadcast %10 : vector<16x8x1xf32> to vector<16x8x64xf32>
    %14 = arith.subf %3, %13 : vector<16x8x64xf32>
    %15 = arith.mulf %12, %12 : vector<16x8x64xf32>
    %cst_8 = arith.constant dense<0.000000e+00> : vector<16x8xf32>
    %16 = vector.multi_reduction <add>, %15, %cst_8 [2] : vector<16x8x64xf32> to vector<16x8xf32>
    %17 = vector.shape_cast %16 : vector<16x8xf32> to vector<16x8x1xf32>
    %18 = arith.mulf %14, %14 : vector<16x8x64xf32>
    %cst_9 = arith.constant dense<0.000000e+00> : vector<16x8xf32>
    %19 = vector.multi_reduction <add>, %18, %cst_9 [2] : vector<16x8x64xf32> to vector<16x8xf32>
    %20 = vector.shape_cast %19 : vector<16x8xf32> to vector<16x8x1xf32>
    %21 = arith.addf %17, %20 : vector<16x8x1xf32>
    %cst_10 = arith.constant 7.812500e-03 : f32
    %22 = vector.broadcast %cst_10 : f32 to vector<16x8x1xf32>
    %23 = arith.mulf %21, %22 : vector<16x8x1xf32>
    %cst_11 = arith.constant 9.99999974E-6 : f32
    %24 = vector.broadcast %cst_11 : f32 to vector<16x8x1xf32>
    %25 = arith.addf %23, %24 : vector<16x8x1xf32>
    %26 = math.rsqrt %25 : vector<16x8x1xf32>
    %27 = vector.broadcast %26 : vector<16x8x1xf32> to vector<16x8x64xf32>
    %28 = arith.mulf %12, %27 : vector<16x8x64xf32>
    %29 = arith.truncf %28 : vector<16x8x64xf32> to vector<16x8x64xbf16>
    %30 = vector.shape_cast %29 : vector<16x8x64xbf16> to vector<128x64xbf16>
    %31 = vector.broadcast %26 : vector<16x8x1xf32> to vector<16x8x64xf32>
    %32 = arith.mulf %14, %31 : vector<16x8x64xf32>
    %33 = arith.truncf %32 : vector<16x8x64xf32> to vector<16x8x64xbf16>
    %34 = vector.shape_cast %33 : vector<16x8x64xbf16> to vector<128x64xbf16>
    %c0_12 = arith.constant 0 : index
    %c0_13 = arith.constant 0 : index
    %35 = vector.load %arg2[%c0_12, %c0_13] : memref<64x64xbf16, #tpu.memory_space<vmem>>, vector<64x64xbf16>
    %cst_14 = arith.constant dense<0.000000e+00> : vector<128x64xf32>
    %36 = tpu.matmul %30, %35, %cst_14 {dimension_numbers = #tpu.dot_dimension_numbers<[1], [0], [0], [1], [0, 0, 1, 1], [], []>} : vector<128x64xbf16>, vector<64x64xbf16>, vector<128x64xf32> -> vector<128x64xf32>
    %c0_15 = arith.constant 0 : index
    %c0_16 = arith.constant 0 : index
    %37 = vector.load %arg3[%c0_15, %c0_16] : memref<64x64xbf16, #tpu.memory_space<vmem>>, vector<64x64xbf16>
    %cst_17 = arith.constant dense<0.000000e+00> : vector<128x64xf32>
    %38 = tpu.matmul %34, %37, %cst_17 {dimension_numbers = #tpu.dot_dimension_numbers<[1], [0], [0], [1], [0, 0, 1, 1], [], []>} : vector<128x64xbf16>, vector<64x64xbf16>, vector<128x64xf32> -> vector<128x64xf32>
    %39 = arith.addf %36, %38 : vector<128x64xf32>
    %c0_18 = arith.constant 0 : index
    %c0_19 = arith.constant 0 : index
    %40 = vector.load %arg4[%c0_18, %c0_19] : memref<1x64xf32, #tpu.memory_space<vmem>>, vector<1x64xf32>
    %41 = vector.broadcast %40 : vector<1x64xf32> to vector<128x64xf32>
    %42 = arith.addf %39, %41 : vector<128x64xf32>
    %c0_20 = arith.constant 0 : index
    %c0_21 = arith.constant 0 : index
    %43 = vector.load %arg5[%c0_20, %c0_21] : memref<128x64xf32, #tpu.memory_space<vmem>>, vector<128x64xf32>
    tpu.vector_store %arg5[%c0_20, %c0_21], %42 {strides = array<i32>} : memref<128x64xf32, #tpu.memory_space<vmem>>, vector<128x64xf32>,
    return
  }
  func.func @transform_0(%arg0: i32) -> (i32, i32, i32, i32) {
    %c0_i32 = arith.constant 0 : i32
    %c0_i32_0 = arith.constant 0 : i32
    %c0_i32_1 = arith.constant 0 : i32
    %c0_i32_2 = arith.constant 0 : i32
    return %arg0, %c0_i32, %c0_i32_0, %c0_i32_1 : i32, i32, i32, i32
  }
  func.func @transform_1(%arg0: i32) -> (i32, i32) {
    %c0_i32 = arith.constant 0 : i32
    %c0_i32_0 = arith.constant 0 : i32
    %c0_i32_1 = arith.constant 0 : i32
    return %c0_i32, %c0_i32_0 : i32, i32
  }
  func.func @transform_2(%arg0: i32) -> (i32, i32) {
    %c0_i32 = arith.constant 0 : i32
    %c0_i32_0 = arith.constant 0 : i32
    %c0_i32_1 = arith.constant 0 : i32
    return %c0_i32, %c0_i32_0 : i32, i32
  }
  func.func @transform_3(%arg0: i32) -> (i32, i32) {
    %c0_i32 = arith.constant 0 : i32
    %c0_i32_0 = arith.constant 0 : i32
    %c0_i32_1 = arith.constant 0 : i32
    return %c0_i32, %c0_i32_0 : i32, i32
  }
  func.func @transform_4(%arg0: i32) -> (i32, i32) {
    %c0_i32 = arith.constant 0 : i32
    %c0_i32_0 = arith.constant 0 : i32
    return %arg0, %c0_i32 : i32, i32
  }
}

</mosaic_0001>

<llo_original>
// kernel: patch_merging.1
$region0: #{patch_merging.1}
  #allocation0 [shape = 'u32[]', space=smem, size = 0x4, offset = 0x4, fixed_abs, tag = 'smem constant byte address 0x4 - core index']
  #allocation1 [shape = 'u32[144,128]{1,0:T(1,128)}', space=vmem, size = 0x12000, scoped, tag = 'internal scratch']
  %s0 = inlined_call_operand.vmem [shape: f32[16,2,8,64], index: 0, kind: input, shape index: {}]
  %s1 = inlined_call_operand.vmem [shape: bf16[64,64], index: 1, kind: input, shape index: {}]
  %s2 = inlined_call_operand.vmem [shape: bf16[64,64], index: 2, kind: input, shape index: {}]
  %s3 = inlined_call_operand.vmem [shape: f32[1,64], index: 3, kind: input, shape index: {}]
  %s4 = inlined_call_operand.hbm [shape: f32[128,64], index: 4, kind: output, shape index: {}]
  %s5 = sld [smem:[#allocation0]]
  $region26: #{patch_merging.1} parent=0
    _
  %s7 = ssub.s32 1, %s5
  %s8 = scalar_select 0, %s7, %s5
  $region1: #{patch_merging.1} parent=0
    #allocation2 [shape = 'u8[65536]{0}', space=vmem, size = 0x10000, scoped, tag = 'output window, operand 0, single buffered']
    #allocation3 [shape = 's32[1]{0}', space=sflag, size = 0x4, scoped, tag = 'scoped memory for patch_merging.1']
    %9 = vsyncpa [#allocation3], 0
    // Predicated region
    $region2: #{patch_merging.1} parent=1 // pred_check
      _
    $region3: #{patch_merging.1} parent=1 // pred_check_branch
      %11 = sbr.rel (0) target = $region5
    $region4: #{patch_merging.1} parent=1 // pred_region
      _
    $region5: #{patch_merging.1} parent=1 // pred_fallthru
      _
    // Predicated region
    $region6: #{patch_merging.1} parent=1 // pred_check
      _
    $region7: #{patch_merging.1} parent=1 // pred_check_branch
      %13 = sbr.rel (0) target = $region9
    $region8: #{patch_merging.1} parent=1 // pred_region
      _
    $region9: #{patch_merging.1} parent=1 // pred_fallthru
      _
    // Predicated region
    $region10: #{patch_merging.1} parent=1 // pred_check
      _
    $region11: #{patch_merging.1} parent=1 // pred_check_branch
      %15 = sbr.rel (0) target = $region13
    $region12: #{patch_merging.1} parent=1 // pred_region
      _
    $region13: #{patch_merging.1} parent=1 // pred_fallthru
      _
    // Predicated region
    $region14: #{patch_merging.1} parent=1 // pred_check
      _
    $region15: #{patch_merging.1} parent=1 // pred_check_branch
      %17 = sbr.rel (0) target = $region17
    $region16: #{patch_merging.1} parent=1 // pred_region
      _
    $region17: #{patch_merging.1} parent=1 // pred_fallthru
      _
    %v19 = vld [vmem:[%s0] sm:$0xff]
    %v20 = vld [vmem:[%s0 + $0x10] sm:$0xff]
    %v21 = vld [vmem:[%s0 + $0x20] sm:$0xff]
    %v22 = vld [vmem:[%s0 + $0x30] sm:$0xff]
    %v23 = vld [vmem:[%s0 + $0x40] sm:$0xff]
    %v24 = vld [vmem:[%s0 + $0x50] sm:$0xff]
    %v25 = vld [vmem:[%s0 + $0x60] sm:$0xff]
    %v26 = vld [vmem:[%s0 + $0x70] sm:$0xff]
    %v27 = vld [vmem:[%s0 + $0x80] sm:$0xff]
    %v28 = vld [vmem:[%s0 + $0x90] sm:$0xff]
    %v29 = vld [vmem:[%s0 + $0xa0] sm:$0xff]
    %v30 = vld [vmem:[%s0 + $0xb0] sm:$0xff]
    %v31 = vld [vmem:[%s0 + $0xc0] sm:$0xff]
    %v32 = vld [vmem:[%s0 + $0xd0] sm:$0xff]
    %v33 = vld [vmem:[%s0 + $0xe0] sm:$0xff]
    %v34 = vld [vmem:[%s0 + $0xf0] sm:$0xff]
    %s35 = scalar_lea.vmem %s0, 8
    %v36 = vld [vmem:[%s35] sm:$0xff]
    %v37 = vld [vmem:[%s35 + $0x10] sm:$0xff]
    %v38 = vld [vmem:[%s35 + $0x20] sm:$0xff]
    %v39 = vld [vmem:[%s35 + $0x30] sm:$0xff]
    %v40 = vld [vmem:[%s35 + $0x40] sm:$0xff]
    %v41 = vld [vmem:[%s35 + $0x50] sm:$0xff]
    %v42 = vld [vmem:[%s35 + $0x60] sm:$0xff]
    %v43 = vld [vmem:[%s35 + $0x70] sm:$0xff]
    %v44 = vld [vmem:[%s35 + $0x80] sm:$0xff]
    %v45 = vld [vmem:[%s35 + $0x90] sm:$0xff]
    %v46 = vld [vmem:[%s35 + $0xa0] sm:$0xff]
    %v47 = vld [vmem:[%s35 + $0xb0] sm:$0xff]
    %v48 = vld [vmem:[%s35 + $0xc0] sm:$0xff]
    %v49 = vld [vmem:[%s35 + $0xd0] sm:$0xff]
    %v50 = vld [vmem:[%s35 + $0xe0] sm:$0xff]
    %v51 = vld [vmem:[%s35 + $0xf0] sm:$0xff]
    %vm52 = vcmask 523264
    %v53 = vsel %vm52, %v19, 0.0
    %54 = vadd.xlane.f32.xlu0 %v53
    %v55 = vpop.xlane.xlu0 %54
    %v56 = vsel %vm52, %v20, 0.0
    %57 = vadd.xlane.f32.xlu0 %v56
    %v58 = vpop.xlane.xlu0 %57
    %v59 = vsel %vm52, %v21, 0.0
    %60 = vadd.xlane.f32.xlu0 %v59
    %v61 = vpop.xlane.xlu0 %60
    %v62 = vsel %vm52, %v22, 0.0
    %63 = vadd.xlane.f32.xlu0 %v62
    %v64 = vpop.xlane.xlu0 %63
    %v65 = vsel %vm52, %v23, 0.0
    %66 = vadd.xlane.f32.xlu0 %v65
    %v67 = vpop.xlane.xlu0 %66
    %v68 = vsel %vm52, %v24, 0.0
    %69 = vadd.xlane.f32.xlu0 %v68
    %v70 = vpop.xlane.xlu0 %69
    %v71 = vsel %vm52, %v25, 0.0
    %72 = vadd.xlane.f32.xlu0 %v71
    %v73 = vpop.xlane.xlu0 %72
    %v74 = vsel %vm52, %v26, 0.0
    %75 = vadd.xlane.f32.xlu0 %v74
    %v76 = vpop.xlane.xlu0 %75
    %v77 = vsel %vm52, %v27, 0.0
    %78 = vadd.xlane.f32.xlu0 %v77
    %v79 = vpop.xlane.xlu0 %78
    %v80 = vsel %vm52, %v28, 0.0
    %81 = vadd.xlane.f32.xlu0 %v80
    %v82 = vpop.xlane.xlu0 %81
    %v83 = vsel %vm52, %v29, 0.0
    %84 = vadd.xlane.f32.xlu0 %v83
    %v85 = vpop.xlane.xlu0 %84
    %v86 = vsel %vm52, %v30, 0.0
    %87 = vadd.xlane.f32.xlu0 %v86
    %v88 = vpop.xlane.xlu0 %87
    %v89 = vsel %vm52, %v31, 0.0
    %90 = vadd.xlane.f32.xlu0 %v89
    %v91 = vpop.xlane.xlu0 %90
    %v92 = vsel %vm52, %v32, 0.0
    %93 = vadd.xlane.f32.xlu0 %v92
    %v94 = vpop.xlane.xlu0 %93
    %v95 = vsel %vm52, %v33, 0.0
    %96 = vadd.xlane.f32.xlu0 %v95
    %v97 = vpop.xlane.xlu0 %96
    %v98 = vsel %vm52, %v34, 0.0
    %99 = vadd.xlane.f32.xlu0 %v98
    %v100 = vpop.xlane.xlu0 %99
    %v101 = vsel %vm52, %v36, 0.0
    %102 = vadd.xlane.f32.xlu0 %v101
    %v103 = vpop.xlane.xlu0 %102
    %v104 = vsel %vm52, %v37, 0.0
    %105 = vadd.xlane.f32.xlu0 %v104
    %v106 = vpop.xlane.xlu0 %105
    %v107 = vsel %vm52, %v38, 0.0
    %108 = vadd.xlane.f32.xlu0 %v107
    %v109 = vpop.xlane.xlu0 %108
    %v110 = vsel %vm52, %v39, 0.0
    %111 = vadd.xlane.f32.xlu0 %v110
    %v112 = vpop.xlane.xlu0 %111
    %v113 = vsel %vm52, %v40, 0.0
    %114 = vadd.xlane.f32.xlu0 %v113
    %v115 = vpop.xlane.xlu0 %114
    %v116 = vsel %vm52, %v41, 0.0
    %117 = vadd.xlane.f32.xlu0 %v116
    %v118 = vpop.xlane.xlu0 %117
    %v119 = vsel %vm52, %v42, 0.0
    %120 = vadd.xlane.f32.xlu0 %v119
    %v121 = vpop.xlane.xlu0 %120
    %v122 = vsel %vm52, %v43, 0.0
    %123 = vadd.xlane.f32.xlu0 %v122
    %v124 = vpop.xlane.xlu0 %123
    %v125 = vsel %vm52, %v44, 0.0
    %126 = vadd.xlane.f32.xlu0 %v125
    %v127 = vpop.xlane.xlu0 %126
    %v128 = vsel %vm52, %v45, 0.0
    %129 = vadd.xlane.f32.xlu0 %v128
    %v130 = vpop.xlane.xlu0 %129
    %v131 = vsel %vm52, %v46, 0.0
    %132 = vadd.xlane.f32.xlu0 %v131
    %v133 = vpop.xlane.xlu0 %132
    %v134 = vsel %vm52, %v47, 0.0
    %135 = vadd.xlane.f32.xlu0 %v134
    %v136 = vpop.xlane.xlu0 %135
    %v137 = vsel %vm52, %v48, 0.0
    %138 = vadd.xlane.f32.xlu0 %v137
    %v139 = vpop.xlane.xlu0 %138
    %v140 = vsel %vm52, %v49, 0.0
    %141 = vadd.xlane.f32.xlu0 %v140
    %v142 = vpop.xlane.xlu0 %141
    %v143 = vsel %vm52, %v50, 0.0
    %144 = vadd.xlane.f32.xlu0 %v143
    %v145 = vpop.xlane.xlu0 %144
    %v146 = vsel %vm52, %v51, 0.0
    %147 = vadd.xlane.f32.xlu0 %v146
    %v148 = vpop.xlane.xlu0 %147
    %v149 = vadd.f32 %v55, %v103
    %v150 = vadd.f32 %v58, %v106
    %v151 = vadd.f32 %v61, %v109
    %v152 = vadd.f32 %v64, %v112
    %v153 = vadd.f32 %v67, %v115
    %v154 = vadd.f32 %v70, %v118
    %v155 = vadd.f32 %v73, %v121
    %v156 = vadd.f32 %v76, %v124
    %v157 = vadd.f32 %v79, %v127
    %v158 = vadd.f32 %v82, %v130
    %v159 = vadd.f32 %v85, %v133
    %v160 = vadd.f32 %v88, %v136
    %v161 = vadd.f32 %v91, %v139
    %v162 = vadd.f32 %v94, %v142
    %v163 = vadd.f32 %v97, %v145
    %v164 = vadd.f32 %v100, %v148
    %v165 = vmul.f32 %v149, 0.0078125
    %v166 = vmul.f32 %v150, 0.0078125
    %v167 = vmul.f32 %v151, 0.0078125
    %v168 = vmul.f32 %v152, 0.0078125
    %v169 = vmul.f32 %v153, 0.0078125
    %v170 = vmul.f32 %v154, 0.0078125
    %v171 = vmul.f32 %v155, 0.0078125
    %v172 = vmul.f32 %v156, 0.0078125
    %v173 = vmul.f32 %v157, 0.0078125
    %v174 = vmul.f32 %v158, 0.0078125
    %v175 = vmul.f32 %v159, 0.0078125
    %v176 = vmul.f32 %v160, 0.0078125
    %v177 = vmul.f32 %v161, 0.0078125
    %v178 = vmul.f32 %v162, 0.0078125
    %v179 = vmul.f32 %v163, 0.0078125
    %v180 = vmul.f32 %v164, 0.0078125
    %v181 = vsub.f32 %v19, %v165
    %v182 = vsub.f32 %v20, %v166
    %v183 = vsub.f32 %v21, %v167
    %v184 = vsub.f32 %v22, %v168
    %v185 = vsub.f32 %v23, %v169
    %v186 = vsub.f32 %v24, %v170
    %v187 = vsub.f32 %v25, %v171
    %v188 = vsub.f32 %v26, %v172
    %v189 = vsub.f32 %v27, %v173
    %v190 = vsub.f32 %v28, %v174
    %v191 = vsub.f32 %v29, %v175
    %v192 = vsub.f32 %v30, %v176
    %v193 = vsub.f32 %v31, %v177
    %v194 = vsub.f32 %v32, %v178
    %v195 = vsub.f32 %v33, %v179
    %v196 = vsub.f32 %v34, %v180
    %v197 = vsub.f32 %v36, %v165
    %v198 = vsub.f32 %v37, %v166
    %v199 = vsub.f32 %v38, %v167
    %v200 = vsub.f32 %v39, %v168
    %v201 = vsub.f32 %v40, %v169
    %v202 = vsub.f32 %v41, %v170
    %v203 = vsub.f32 %v42, %v171
    %v204 = vsub.f32 %v43, %v172
    %v205 = vsub.f32 %v44, %v173
    %v206 = vsub.f32 %v45, %v174
    %v207 = vsub.f32 %v46, %v175
    %v208 = vsub.f32 %v47, %v176
    %v209 = vsub.f32 %v48, %v177
    %v210 = vsub.f32 %v49, %v178
    %v211 = vsub.f32 %v50, %v179
    %v212 = vsub.f32 %v51, %v180
    %v213 = vmul.f32 %v181, %v181
    %v214 = vmul.f32 %v182, %v182
    %v215 = vmul.f32 %v183, %v183
    %v216 = vmul.f32 %v184, %v184
    %v217 = vmul.f32 %v185, %v185
    %v218 = vmul.f32 %v186, %v186
    %v219 = vmul.f32 %v187, %v187
    %v220 = vmul.f32 %v188, %v188
    %v221 = vmul.f32 %v189, %v189
    %v222 = vmul.f32 %v190, %v190
    %v223 = vmul.f32 %v191, %v191
    %v224 = vmul.f32 %v192, %v192
    %v225 = vmul.f32 %v193, %v193
    %v226 = vmul.f32 %v194, %v194
    %v227 = vmul.f32 %v195, %v195
    %v228 = vmul.f32 %v196, %v196
    %v229 = vsel %vm52, %v213, 0.0
    %230 = vadd.xlane.f32.xlu0 %v229
    %v231 = vpop.xlane.xlu0 %230
    %v232 = vsel %vm52, %v214, 0.0
    %233 = vadd.xlane.f32.xlu0 %v232
    %v234 = vpop.xlane.xlu0 %233
    %v235 = vsel %vm52, %v215, 0.0
    %236 = vadd.xlane.f32.xlu0 %v235
    %v237 = vpop.xlane.xlu0 %236
    %v238 = vsel %vm52, %v216, 0.0
    %239 = vadd.xlane.f32.xlu0 %v238
    %v240 = vpop.xlane.xlu0 %239
    %v241 = vsel %vm52, %v217, 0.0
    %242 = vadd.xlane.f32.xlu0 %v241
    %v243 = vpop.xlane.xlu0 %242
    %v244 = vsel %vm52, %v218, 0.0
    %245 = vadd.xlane.f32.xlu0 %v244
    %v246 = vpop.xlane.xlu0 %245
    %v247 = vsel %vm52, %v219, 0.0
    %248 = vadd.xlane.f32.xlu0 %v247
    %v249 = vpop.xlane.xlu0 %248
    %v250 = vsel %vm52, %v220, 0.0
    %251 = vadd.xlane.f32.xlu0 %v250
    %v252 = vpop.xlane.xlu0 %251
    %v253 = vsel %vm52, %v221, 0.0
    %254 = vadd.xlane.f32.xlu0 %v253
    %v255 = vpop.xlane.xlu0 %254
    %v256 = vsel %vm52, %v222, 0.0
    %257 = vadd.xlane.f32.xlu0 %v256
    %v258 = vpop.xlane.xlu0 %257
    %v259 = vsel %vm52, %v223, 0.0
    %260 = vadd.xlane.f32.xlu0 %v259
    %v261 = vpop.xlane.xlu0 %260
    %v262 = vsel %vm52, %v224, 0.0
    %263 = vadd.xlane.f32.xlu0 %v262
    %v264 = vpop.xlane.xlu0 %263
    %v265 = vsel %vm52, %v225, 0.0
    %266 = vadd.xlane.f32.xlu0 %v265
    %v267 = vpop.xlane.xlu0 %266
    %v268 = vsel %vm52, %v226, 0.0
    %269 = vadd.xlane.f32.xlu0 %v268
    %v270 = vpop.xlane.xlu0 %269
    %v271 = vsel %vm52, %v227, 0.0
    %272 = vadd.xlane.f32.xlu0 %v271
    %v273 = vpop.xlane.xlu0 %272
    %v274 = vsel %vm52, %v228, 0.0
    %275 = vadd.xlane.f32.xlu0 %v274
    %v276 = vpop.xlane.xlu0 %275
    %v277 = vmul.f32 %v197, %v197
    %v278 = vmul.f32 %v198, %v198
    %v279 = vmul.f32 %v199, %v199
    %v280 = vmul.f32 %v200, %v200
    %v281 = vmul.f32 %v201, %v201
    %v282 = vmul.f32 %v202, %v202
    %v283 = vmul.f32 %v203, %v203
    %v284 = vmul.f32 %v204, %v204
    %v285 = vmul.f32 %v205, %v205
    %v286 = vmul.f32 %v206, %v206
    %v287 = vmul.f32 %v207, %v207
    %v288 = vmul.f32 %v208, %v208
    %v289 = vmul.f32 %v209, %v209
    %v290 = vmul.f32 %v210, %v210
    %v291 = vmul.f32 %v211, %v211
    %v292 = vmul.f32 %v212, %v212
    %v293 = vsel %vm52, %v277, 0.0
    %294 = vadd.xlane.f32.xlu0 %v293
    %v295 = vpop.xlane.xlu0 %294
    %v296 = vsel %vm52, %v278, 0.0
    %297 = vadd.xlane.f32.xlu0 %v296
    %v298 = vpop.xlane.xlu0 %297
    %v299 = vsel %vm52, %v279, 0.0
    %300 = vadd.xlane.f32.xlu0 %v299
    %v301 = vpop.xlane.xlu0 %300
    %v302 = vsel %vm52, %v280, 0.0
    %303 = vadd.xlane.f32.xlu0 %v302
    %v304 = vpop.xlane.xlu0 %303
    %v305 = vsel %vm52, %v281, 0.0
    %306 = vadd.xlane.f32.xlu0 %v305
    %v307 = vpop.xlane.xlu0 %306
    %v308 = vsel %vm52, %v282, 0.0
    %309 = vadd.xlane.f32.xlu0 %v308
    %v310 = vpop.xlane.xlu0 %309
    %v311 = vsel %vm52, %v283, 0.0
    %312 = vadd.xlane.f32.xlu0 %v311
    %v313 = vpop.xlane.xlu0 %312
    %v314 = vsel %vm52, %v284, 0.0
    %315 = vadd.xlane.f32.xlu0 %v314
    %v316 = vpop.xlane.xlu0 %315
    %v317 = vsel %vm52, %v285, 0.0
    %318 = vadd.xlane.f32.xlu0 %v317
    %v319 = vpop.xlane.xlu0 %318
    %v320 = vsel %vm52, %v286, 0.0
    %321 = vadd.xlane.f32.xlu0 %v320
    %v322 = vpop.xlane.xlu0 %321
    %v323 = vsel %vm52, %v287, 0.0
    %324 = vadd.xlane.f32.xlu0 %v323
    %v325 = vpop.xlane.xlu0 %324
    %v326 = vsel %vm52, %v288, 0.0
    %327 = vadd.xlane.f32.xlu0 %v326
    %v328 = vpop.xlane.xlu0 %327
    %v329 = vsel %vm52, %v289, 0.0
    %330 = vadd.xlane.f32.xlu0 %v329
    %v331 = vpop.xlane.xlu0 %330
    %v332 = vsel %vm52, %v290, 0.0
    %333 = vadd.xlane.f32.xlu0 %v332
    %v334 = vpop.xlane.xlu0 %333
    %v335 = vsel %vm52, %v291, 0.0
    %336 = vadd.xlane.f32.xlu0 %v335
    %v337 = vpop.xlane.xlu0 %336
    %v338 = vsel %vm52, %v292, 0.0
    %339 = vadd.xlane.f32.xlu0 %v338
    %v340 = vpop.xlane.xlu0 %339
    %v341 = vadd.f32 %v231, %v295
    %v342 = vadd.f32 %v234, %v298
    %v343 = vadd.f32 %v237, %v301
    %v344 = vadd.f32 %v240, %v304
    %v345 = vadd.f32 %v243, %v307
    %v346 = vadd.f32 %v246, %v310
    %v347 = vadd.f32 %v249, %v313
    %v348 = vadd.f32 %v252, %v316
    %v349 = vadd.f32 %v255, %v319
    %v350 = vadd.f32 %v258, %v322
    %v351 = vadd.f32 %v261, %v325
    %v352 = vadd.f32 %v264, %v328
    %v353 = vadd.f32 %v267, %v331
    %v354 = vadd.f32 %v270, %v334
    %v355 = vadd.f32 %v273, %v337
    %v356 = vadd.f32 %v276, %v340
    %v357 = vmul.f32 %v341, 0.0078125
    %v358 = vmul.f32 %v342, 0.0078125
    %v359 = vmul.f32 %v343, 0.0078125
    %v360 = vmul.f32 %v344, 0.0078125
    %v361 = vmul.f32 %v345, 0.0078125
    %v362 = vmul.f32 %v346, 0.0078125
    %v363 = vmul.f32 %v347, 0.0078125
    %v364 = vmul.f32 %v348, 0.0078125
    %v365 = vmul.f32 %v349, 0.0078125
    %v366 = vmul.f32 %v350, 0.0078125
    %v367 = vmul.f32 %v351, 0.0078125
    %v368 = vmul.f32 %v352, 0.0078125
    %v369 = vmul.f32 %v353, 0.0078125
    %v370 = vmul.f32 %v354, 0.0078125
    %v371 = vmul.f32 %v355, 0.0078125
    %v372 = vmul.f32 %v356, 0.0078125
    %v373 = vadd.f32 %v357, 1e-05
    %v374 = vadd.f32 %v358, 1e-05
    %v375 = vadd.f32 %v359, 1e-05
    %v376 = vadd.f32 %v360, 1e-05
    %v377 = vadd.f32 %v361, 1e-05
    %v378 = vadd.f32 %v362, 1e-05
    %v379 = vadd.f32 %v363, 1e-05
    %v380 = vadd.f32 %v364, 1e-05
    %v381 = vadd.f32 %v365, 1e-05
    %v382 = vadd.f32 %v366, 1e-05
    %v383 = vadd.f32 %v367, 1e-05
    %v384 = vadd.f32 %v368, 1e-05
    %v385 = vadd.f32 %v369, 1e-05
    %v386 = vadd.f32 %v370, 1e-05
    %v387 = vadd.f32 %v371, 1e-05
    %v388 = vadd.f32 %v372, 1e-05
    %v389 = vrsqrt.pop %v373
    %v390 = vrsqrt.pop %v374
    %v391 = vrsqrt.pop %v375
    %v392 = vrsqrt.pop %v376
    %v393 = vrsqrt.pop %v377
    %v394 = vrsqrt.pop %v378
    %v395 = vrsqrt.pop %v379
    %v396 = vrsqrt.pop %v380
    %v397 = vrsqrt.pop %v381
    %v398 = vrsqrt.pop %v382
    %v399 = vrsqrt.pop %v383
    %v400 = vrsqrt.pop %v384
    %v401 = vrsqrt.pop %v385
    %v402 = vrsqrt.pop %v386
    %v403 = vrsqrt.pop %v387
    %v404 = vrsqrt.pop %v388
    %v405 = vmul.f32 %v181, %v389
    %v406 = vmul.f32 %v182, %v390
    %v407 = vmul.f32 %v183, %v391
    %v408 = vmul.f32 %v184, %v392
    %v409 = vmul.f32 %v185, %v393
    %v410 = vmul.f32 %v186, %v394
    %v411 = vmul.f32 %v187, %v395
    %v412 = vmul.f32 %v188, %v396
    %v413 = vmul.f32 %v189, %v397
    %v414 = vmul.f32 %v190, %v398
    %v415 = vmul.f32 %v191, %v399
    %v416 = vmul.f32 %v192, %v400
    %v417 = vmul.f32 %v193, %v401
    %v418 = vmul.f32 %v194, %v402
    %v419 = vmul.f32 %v195, %v403
    %v420 = vmul.f32 %v196, %v404
    %v421 = vpack.c.bf16 %v405, %v405
    %v422 = vpack.c.bf16 %v406, %v406
    %v423 = vpack.c.bf16 %v407, %v407
    %v424 = vpack.c.bf16 %v408, %v408
    %v425 = vpack.c.bf16 %v409, %v409
    %v426 = vpack.c.bf16 %v410, %v410
    %v427 = vpack.c.bf16 %v411, %v411
    %v428 = vpack.c.bf16 %v412, %v412
    %v429 = vpack.c.bf16 %v413, %v413
    %v430 = vpack.c.bf16 %v414, %v414
    %v431 = vpack.c.bf16 %v415, %v415
    %v432 = vpack.c.bf16 %v416, %v416
    %v433 = vpack.c.bf16 %v417, %v417
    %v434 = vpack.c.bf16 %v418, %v418
    %v435 = vpack.c.bf16 %v419, %v419
    %v436 = vpack.c.bf16 %v420, %v420
    %v437 = vmul.f32 %v197, %v389
    %v438 = vmul.f32 %v198, %v390
    %v439 = vmul.f32 %v199, %v391
    %v440 = vmul.f32 %v200, %v392
    %v441 = vmul.f32 %v201, %v393
    %v442 = vmul.f32 %v202, %v394
    %v443 = vmul.f32 %v203, %v395
    %v444 = vmul.f32 %v204, %v396
    %v445 = vmul.f32 %v205, %v397
    %v446 = vmul.f32 %v206, %v398
    %v447 = vmul.f32 %v207, %v399
    %v448 = vmul.f32 %v208, %v400
    %v449 = vmul.f32 %v209, %v401
    %v450 = vmul.f32 %v210, %v402
    %v451 = vmul.f32 %v211, %v403
    %v452 = vmul.f32 %v212, %v404
    %v453 = vpack.c.bf16 %v437, %v437
    %v454 = vpack.c.bf16 %v438, %v438
    %v455 = vpack.c.bf16 %v439, %v439
    %v456 = vpack.c.bf16 %v440, %v440
    %v457 = vpack.c.bf16 %v441, %v441
    %v458 = vpack.c.bf16 %v442, %v442
    %v459 = vpack.c.bf16 %v443, %v443
    %v460 = vpack.c.bf16 %v444, %v444
    %v461 = vpack.c.bf16 %v445, %v445
    %v462 = vpack.c.bf16 %v446, %v446
    %v463 = vpack.c.bf16 %v447, %v447
    %v464 = vpack.c.bf16 %v448, %v448
    %v465 = vpack.c.bf16 %v449, %v449
    %v466 = vpack.c.bf16 %v450, %v450
    %v467 = vpack.c.bf16 %v451, %v451
    %v468 = vpack.c.bf16 %v452, %v452
    %v469 = vld [vmem:[%s1] sm:$0xf]
    %v470 = vld [vmem:[%s1 + $0x4] sm:$0xf]
    %v471 = vld [vmem:[%s1 + $0x8] sm:$0xf]
    %v472 = vld [vmem:[%s1 + $0xc] sm:$0xf]
    %v473 = vld [vmem:[%s1 + $0x10] sm:$0xf]
    %v474 = vld [vmem:[%s1 + $0x14] sm:$0xf]
    %v475 = vld [vmem:[%s1 + $0x18] sm:$0xf]
    %v476 = vld [vmem:[%s1 + $0x1c] sm:$0xf]
    %v477 = vld [vmem:[%s2] sm:$0xf]
    %v478 = vld [vmem:[%s2 + $0x4] sm:$0xf]
    %v479 = vld [vmem:[%s2 + $0x8] sm:$0xf]
    %v480 = vld [vmem:[%s2 + $0xc] sm:$0xf]
    %v481 = vld [vmem:[%s2 + $0x10] sm:$0xf]
    %v482 = vld [vmem:[%s2 + $0x14] sm:$0xf]
    %v483 = vld [vmem:[%s2 + $0x18] sm:$0xf]
    %v484 = vld [vmem:[%s2 + $0x1c] sm:$0xf]
    %v501 = vunpack.c.l.b16 %v453
    %v502 = vunpack.c.l.b16 %v454
    %v503 = vunpack.c.l.b16 %v455
    %v504 = vunpack.c.l.b16 %v456
    %v505 = vunpack.c.l.b16 %v457
    %v506 = vunpack.c.l.b16 %v458
    %v507 = vunpack.c.l.b16 %v459
    %v508 = vunpack.c.l.b16 %v460
    %v509 = vunpack.c.l.b16 %v461
    %v510 = vunpack.c.l.b16 %v462
    %v511 = vunpack.c.l.b16 %v463
    %v512 = vunpack.c.l.b16 %v464
    %v513 = vunpack.c.l.b16 %v465
    %v514 = vunpack.c.l.b16 %v466
    %v515 = vunpack.c.l.b16 %v467
    %v516 = vunpack.c.l.b16 %v468
    %v517 = vpack.c.b16 %v502, %v501
    %v518 = vpack.c.b16 %v504, %v503
    %v519 = vpack.c.b16 %v506, %v505
    %v520 = vpack.c.b16 %v508, %v507
    %v521 = vpack.c.b16 %v510, %v509
    %v522 = vpack.c.b16 %v512, %v511
    %v523 = vpack.c.b16 %v514, %v513
    %v524 = vpack.c.b16 %v516, %v515
    %v533 = vunpack.c.l.b16 %v477
    %v534 = vunpack.c.l.b16 %v478
    %v535 = vunpack.c.l.b16 %v479
    %v536 = vunpack.c.l.b16 %v480
    %v537 = vunpack.c.l.b16 %v481
    %v538 = vunpack.c.l.b16 %v482
    %v539 = vunpack.c.l.b16 %v483
    %v540 = vunpack.c.l.b16 %v484
    %v541 = vpack.c.b16 %v534, %v533
    %v542 = vpack.c.b16 %v536, %v535
    %v543 = vpack.c.b16 %v538, %v537
    %v544 = vpack.c.b16 %v540, %v539
    %v550 = vsel %vm52, %v517, 0
    %v553 = vsel %vm52, %v518, 0
    %v556 = vsel %vm52, %v519, 0
    %v559 = vsel %vm52, %v520, 0
    %v562 = vsel %vm52, %v521, 0
    %v565 = vsel %vm52, %v522, 0
    %v568 = vsel %vm52, %v523, 0
    %v571 = vsel %vm52, %v524, 0
    %573 = vmatprep.subr.bf16.mxu0 0
    %574 = vmatpush1.bf16.msra.mxu0 0
    %575 = vmatprep.subr.bf16.mxu0 0
    %576 = vmatpush1.bf16.msra.mxu0 0
    %577 = vmatprep.subr.bf16.mxu0 0
    %578 = vmatpush1.bf16.msra.mxu0 0
    %579 = vmatprep.subr.bf16.mxu0 0
    %580 = vmatpush1.bf16.msra.mxu0 0
    %581 = vmatprep.subr.bf16.mxu0 0
    %582 = vmatpush1.bf16.msra.mxu0 %v544
    %583 = vmatprep.subr.bf16.mxu0 0
    %584 = vmatpush1.bf16.msra.mxu0 %v543
    %585 = vmatprep.subr.bf16.mxu0 0
    %586 = vmatpush1.bf16.msra.mxu0 %v542
    %587 = vmatprep.subr.bf16.mxu0 0
    %588 = vmatpush1.bf16.msra.mxu0 %v541
    %589 = vmatprep.subr.bf16.mxu0 0
    %590 = vmatpush2.bf16.msra.mxu0 0
    %591 = vmatprep.subr.bf16.mxu0 0
    %592 = vmatpush2.bf16.msra.mxu0 0
    %593 = vmatprep.subr.bf16.mxu0 0
    %594 = vmatpush2.bf16.msra.mxu0 0
    %595 = vmatprep.subr.bf16.mxu0 0
    %596 = vmatpush2.bf16.msra.mxu0 0
    %597 = vmatprep.subr.bf16.mxu0 0
    %598 = vmatpush2.bf16.msra.mxu0 0
    %599 = vmatprep.subr.bf16.mxu0 0
    %600 = vmatpush2.bf16.msra.mxu0 0
    %601 = vmatprep.subr.bf16.mxu0 0
    %602 = vmatpush2.bf16.msra.mxu0 0
    %603 = vmatprep.subr.bf16.mxu0 0
    %604 = vmatpush2.bf16.msra.mxu0 0
    %605 = vmatprep.mubr.bf16.mxu0 0
    %606 = vmatmul.mubr.bf16.gmra.mxu0 %v550
    %v607 = vpop.f32.mrf.mxu0
    %v608 = vadd.f32 0.0, %v607
    %v609 = vpop.f32.mrf.mxu0
    %v610 = vpop.f32.mrf.mxu0
    %v611 = vadd.f32 0.0, %v610
    %v612 = vpop.f32.mrf.mxu0
    %613 = vmatprep.mubr.bf16.mxu0 0
    %614 = vmatmul.mubr.bf16.gmra.mxu0 %v553
    %v615 = vpop.f32.mrf.mxu0
    %v616 = vadd.f32 0.0, %v615
    %v617 = vpop.f32.mrf.mxu0
    %v618 = vpop.f32.mrf.mxu0
    %v619 = vadd.f32 0.0, %v618
    %v620 = vpop.f32.mrf.mxu0
    %621 = vmatprep.mubr.bf16.mxu0 0
    %622 = vmatmul.mubr.bf16.gmra.mxu0 %v556
    %v623 = vpop.f32.mrf.mxu0
    %v624 = vadd.f32 0.0, %v623
    %v625 = vpop.f32.mrf.mxu0
    %v626 = vpop.f32.mrf.mxu0
    %v627 = vadd.f32 0.0, %v626
    %v628 = vpop.f32.mrf.mxu0
    %629 = vmatprep.mubr.bf16.mxu0 0
    %630 = vmatmul.mubr.bf16.gmra.mxu0 %v559
    %v631 = vpop.f32.mrf.mxu0
    %v632 = vadd.f32 0.0, %v631
    %v633 = vpop.f32.mrf.mxu0
    %v634 = vpop.f32.mrf.mxu0
    %v635 = vadd.f32 0.0, %v634
    %v636 = vpop.f32.mrf.mxu0
    %637 = vmatprep.mubr.bf16.mxu0 0
    %638 = vmatmul.mubr.bf16.gmra.mxu0 %v562
    %v639 = vpop.f32.mrf.mxu0
    %v640 = vadd.f32 0.0, %v639
    %v641 = vpop.f32.mrf.mxu0
    %v642 = vpop.f32.mrf.mxu0
    %v643 = vadd.f32 0.0, %v642
    %v644 = vpop.f32.mrf.mxu0
    %645 = vmatprep.mubr.bf16.mxu0 0
    %646 = vmatmul.mubr.bf16.gmra.mxu0 %v565
    %v647 = vpop.f32.mrf.mxu0
    %v648 = vadd.f32 0.0, %v647
    %v649 = vpop.f32.mrf.mxu0
    %v650 = vpop.f32.mrf.mxu0
    %v651 = vadd.f32 0.0, %v650
    %v652 = vpop.f32.mrf.mxu0
    %653 = vmatprep.mubr.bf16.mxu0 0
    %654 = vmatmul.mubr.bf16.gmra.mxu0 %v568
    %v655 = vpop.f32.mrf.mxu0
    %v656 = vadd.f32 0.0, %v655
    %v657 = vpop.f32.mrf.mxu0
    %v658 = vpop.f32.mrf.mxu0
    %v659 = vadd.f32 0.0, %v658
    %v660 = vpop.f32.mrf.mxu0
    %661 = vmatprep.mubr.bf16.mxu0 0
    %662 = vmatmul.mubr.bf16.gmra.mxu0 %v571
    %v663 = vpop.f32.mrf.mxu0
    %v664 = vadd.f32 0.0, %v663
    %v665 = vpop.f32.mrf.mxu0
    %v666 = vpop.f32.mrf.mxu0
    %v667 = vadd.f32 0.0, %v666
    %v668 = vpop.f32.mrf.mxu0
    %669 = vdwg.mxu0
    %v686 = vunpack.c.l.b16 %v421
    %v687 = vunpack.c.l.b16 %v422
    %v688 = vunpack.c.l.b16 %v423
    %v689 = vunpack.c.l.b16 %v424
    %v690 = vunpack.c.l.b16 %v425
    %v691 = vunpack.c.l.b16 %v426
    %v692 = vunpack.c.l.b16 %v427
    %v693 = vunpack.c.l.b16 %v428
    %v694 = vunpack.c.l.b16 %v429
    %v695 = vunpack.c.l.b16 %v430
    %v696 = vunpack.c.l.b16 %v431
    %v697 = vunpack.c.l.b16 %v432
    %v698 = vunpack.c.l.b16 %v433
    %v699 = vunpack.c.l.b16 %v434
    %v700 = vunpack.c.l.b16 %v435
    %v701 = vunpack.c.l.b16 %v436
    %v702 = vpack.c.b16 %v687, %v686
    %v703 = vpack.c.b16 %v689, %v688
    %v704 = vpack.c.b16 %v691, %v690
    %v705 = vpack.c.b16 %v693, %v692
    %v706 = vpack.c.b16 %v695, %v694
    %v707 = vpack.c.b16 %v697, %v696
    %v708 = vpack.c.b16 %v699, %v698
    %v709 = vpack.c.b16 %v701, %v700
    %v718 = vunpack.c.l.b16 %v469
    %v719 = vunpack.c.l.b16 %v470
    %v720 = vunpack.c.l.b16 %v471
    %v721 = vunpack.c.l.b16 %v472
    %v722 = vunpack.c.l.b16 %v473
    %v723 = vunpack.c.l.b16 %v474
    %v724 = vunpack.c.l.b16 %v475
    %v725 = vunpack.c.l.b16 %v476
    %v726 = vpack.c.b16 %v719, %v718
    %v727 = vpack.c.b16 %v721, %v720
    %v728 = vpack.c.b16 %v723, %v722
    %v729 = vpack.c.b16 %v725, %v724
    %v735 = vsel %vm52, %v702, 0
    %v738 = vsel %vm52, %v703, 0
    %v741 = vsel %vm52, %v704, 0
    %v744 = vsel %vm52, %v705, 0
    %v747 = vsel %vm52, %v706, 0
    %v750 = vsel %vm52, %v707, 0
    %v753 = vsel %vm52, %v708, 0
    %v756 = vsel %vm52, %v709, 0
    %758 = vmatprep.subr.bf16.mxu0 0
    %759 = vmatpush1.bf16.msra.mxu0 0
    %760 = vmatprep.subr.bf16.mxu0 0
    %761 = vmatpush1.bf16.msra.mxu0 0
    %762 = vmatprep.subr.bf16.mxu0 0
    %763 = vmatpush1.bf16.msra.mxu0 0
    %764 = vmatprep.subr.bf16.mxu0 0
    %765 = vmatpush1.bf16.msra.mxu0 0
    %766 = vmatprep.subr.bf16.mxu0 0
    %767 = vmatpush1.bf16.msra.mxu0 %v729
    %768 = vmatprep.subr.bf16.mxu0 0
    %769 = vmatpush1.bf16.msra.mxu0 %v728
    %770 = vmatprep.subr.bf16.mxu0 0
    %771 = vmatpush1.bf16.msra.mxu0 %v727
    %772 = vmatprep.subr.bf16.mxu0 0
    %773 = vmatpush1.bf16.msra.mxu0 %v726
    %774 = vmatprep.subr.bf16.mxu0 0
    %775 = vmatpush2.bf16.msra.mxu0 0
    %776 = vmatprep.subr.bf16.mxu0 0
    %777 = vmatpush2.bf16.msra.mxu0 0
    %778 = vmatprep.subr.bf16.mxu0 0
    %779 = vmatpush2.bf16.msra.mxu0 0
    %780 = vmatprep.subr.bf16.mxu0 0
    %781 = vmatpush2.bf16.msra.mxu0 0
    %782 = vmatprep.subr.bf16.mxu0 0
    %783 = vmatpush2.bf16.msra.mxu0 0
    %784 = vmatprep.subr.bf16.mxu0 0
    %785 = vmatpush2.bf16.msra.mxu0 0
    %786 = vmatprep.subr.bf16.mxu0 0
    %787 = vmatpush2.bf16.msra.mxu0 0
    %788 = vmatprep.subr.bf16.mxu0 0
    %789 = vmatpush2.bf16.msra.mxu0 0
    %790 = vmatprep.mubr.bf16.mxu0 0
    %791 = vmatmul.mubr.bf16.gmra.mxu0 %v735
    %v792 = vpop.f32.mrf.mxu0
    %v793 = vadd.f32 %v608, %v792
    %v794 = vpop.f32.mrf.mxu0
    %v795 = vpop.f32.mrf.mxu0
    %v796 = vadd.f32 %v611, %v795
    %v797 = vpop.f32.mrf.mxu0
    %798 = vmatprep.mubr.bf16.mxu0 0
    %799 = vmatmul.mubr.bf16.gmra.mxu0 %v738
    %v800 = vpop.f32.mrf.mxu0
    %v801 = vadd.f32 %v616, %v800
    %v802 = vpop.f32.mrf.mxu0
    %v803 = vpop.f32.mrf.mxu0
    %v804 = vadd.f32 %v619, %v803
    %v805 = vpop.f32.mrf.mxu0
    %806 = vmatprep.mubr.bf16.mxu0 0
    %807 = vmatmul.mubr.bf16.gmra.mxu0 %v741
    %v808 = vpop.f32.mrf.mxu0
    %v809 = vadd.f32 %v624, %v808
    %v810 = vpop.f32.mrf.mxu0
    %v811 = vpop.f32.mrf.mxu0
    %v812 = vadd.f32 %v627, %v811
    %v813 = vpop.f32.mrf.mxu0
    %814 = vmatprep.mubr.bf16.mxu0 0
    %815 = vmatmul.mubr.bf16.gmra.mxu0 %v744
    %v816 = vpop.f32.mrf.mxu0
    %v817 = vadd.f32 %v632, %v816
    %v818 = vpop.f32.mrf.mxu0
    %v819 = vpop.f32.mrf.mxu0
    %v820 = vadd.f32 %v635, %v819
    %v821 = vpop.f32.mrf.mxu0
    %822 = vmatprep.mubr.bf16.mxu0 0
    %823 = vmatmul.mubr.bf16.gmra.mxu0 %v747
    %v824 = vpop.f32.mrf.mxu0
    %v825 = vadd.f32 %v640, %v824
    %v826 = vpop.f32.mrf.mxu0
    %v827 = vpop.f32.mrf.mxu0
    %v828 = vadd.f32 %v643, %v827
    %v829 = vpop.f32.mrf.mxu0
    %830 = vmatprep.mubr.bf16.mxu0 0
    %831 = vmatmul.mubr.bf16.gmra.mxu0 %v750
    %v832 = vpop.f32.mrf.mxu0
    %v833 = vadd.f32 %v648, %v832
    %v834 = vpop.f32.mrf.mxu0
    %v835 = vpop.f32.mrf.mxu0
    %v836 = vadd.f32 %v651, %v835
    %v837 = vpop.f32.mrf.mxu0
    %838 = vmatprep.mubr.bf16.mxu0 0
    %839 = vmatmul.mubr.bf16.gmra.mxu0 %v753
    %v840 = vpop.f32.mrf.mxu0
    %v841 = vadd.f32 %v656, %v840
    %v842 = vpop.f32.mrf.mxu0
    %v843 = vpop.f32.mrf.mxu0
    %v844 = vadd.f32 %v659, %v843
    %v845 = vpop.f32.mrf.mxu0
    %846 = vmatprep.mubr.bf16.mxu0 0
    %847 = vmatmul.mubr.bf16.gmra.mxu0 %v756
    %v848 = vpop.f32.mrf.mxu0
    %v849 = vadd.f32 %v664, %v848
    %v850 = vpop.f32.mrf.mxu0
    %v851 = vpop.f32.mrf.mxu0
    %v852 = vadd.f32 %v667, %v851
    %v853 = vpop.f32.mrf.mxu0
    %854 = vdwg.mxu0
    %v855 = vld [vmem:[%s3] sm:$0x1]
    %v857 = vlaneseq
    %v858 = vshrl.u32 %v857, 7
    %v859 = vsub.s32 0, %v858
    %v860 = vrot.slane %v855, %v859
    %v862 = vadd.f32 %v793, %v860
    %v863 = vadd.f32 %v796, %v860
    %v864 = vadd.f32 %v801, %v860
    %v865 = vadd.f32 %v804, %v860
    %v866 = vadd.f32 %v809, %v860
    %v867 = vadd.f32 %v812, %v860
    %v868 = vadd.f32 %v817, %v860
    %v869 = vadd.f32 %v820, %v860
    %v870 = vadd.f32 %v825, %v860
    %v871 = vadd.f32 %v828, %v860
    %v872 = vadd.f32 %v833, %v860
    %v873 = vadd.f32 %v836, %v860
    %v874 = vadd.f32 %v841, %v860
    %v875 = vadd.f32 %v844, %v860
    %v876 = vadd.f32 %v849, %v860
    %v877 = vadd.f32 %v852, %v860
    %878 = vst.msk [vmem:[#allocation2] sm:$0xff] %vm52, %v862
    %879 = vst.msk [vmem:[#allocation2 + $0x8] sm:$0xff] %vm52, %v863
    %880 = vst.msk [vmem:[#allocation2 + $0x10] sm:$0xff] %vm52, %v864
    %881 = vst.msk [vmem:[#allocation2 + $0x18] sm:$0xff] %vm52, %v865
    %882 = vst.msk [vmem:[#allocation2 + $0x20] sm:$0xff] %vm52, %v866
    %883 = vst.msk [vmem:[#allocation2 + $0x28] sm:$0xff] %vm52, %v867
    %884 = vst.msk [vmem:[#allocation2 + $0x30] sm:$0xff] %vm52, %v868
    %885 = vst.msk [vmem:[#allocation2 + $0x38] sm:$0xff] %vm52, %v869
    %886 = vst.msk [vmem:[#allocation2 + $0x40] sm:$0xff] %vm52, %v870
    %887 = vst.msk [vmem:[#allocation2 + $0x48] sm:$0xff] %vm52, %v871
    %888 = vst.msk [vmem:[#allocation2 + $0x50] sm:$0xff] %vm52, %v872
    %889 = vst.msk [vmem:[#allocation2 + $0x58] sm:$0xff] %vm52, %v873
    %890 = vst.msk [vmem:[#allocation2 + $0x60] sm:$0xff] %vm52, %v874
    %891 = vst.msk [vmem:[#allocation2 + $0x68] sm:$0xff] %vm52, %v875
    %892 = vst.msk [vmem:[#allocation2 + $0x70] sm:$0xff] %vm52, %v876
    %893 = vst.msk [vmem:[#allocation2 + $0x78] sm:$0xff] %vm52, %v877
    // Predicated region
    $region18: #{patch_merging.1} parent=1 // pred_check
      _
    $region19: #{patch_merging.1} parent=1 // pred_check_branch
      %895 = sbr.rel (0) target = $region21
    $region20: #{patch_merging.1} parent=1 // pred_region
      %s897 = ssub.s32 2048, 2048
      %898 = vsyncadd [#allocation3], %s897
      %s899 = sshll.u32 [#allocation2], 4
      %s900 = int_to_ptr.vmem [resolvable:$true] %s899
      %905 = dma.vmem_to_hbm [thread:$0]  %s900, 2048, %s4, [#allocation3], 128, 128, 8
    $region21: #{patch_merging.1} parent=1 // pred_fallthru
      _
    // Predicated region
    $region22: #{patch_merging.1} parent=1 // pred_check
      _
    $region23: #{patch_merging.1} parent=1 // pred_check_branch
      %907 = sbr.rel (0) target = $region25
    $region24: #{patch_merging.1} parent=1 // pred_region
      %908 = dma.done [#allocation3], 2048
    $region25: #{patch_merging.1} parent=1 // pred_fallthru
      _
    %909 = vsyncpa [#allocation3], 1

</llo_original>
